<compile_context>
chip_gen: v5e
topology: v5e:2x2
jax: 0.10.0
libtpu: 0.0.40
codegen_flags: <defaults>
</compile_context>

<pallas_src>
import math
from functools import partial

import jax
import jax.numpy as jnp
from jax import lax
from jax.experimental import pallas as pl
from jax.experimental.pallas import tpu as pltpu

LOG_SIG_MIN = -20.0
LOG_SIG_MAX = 2.0
LOG_2PI = math.log(2.0 * math.pi)
LOG_2 = math.log(2.0)


# ---------------------------------------------------------------------------
# Kernels
# ---------------------------------------------------------------------------
def _policy_from_heads(heads, eps, action_dim):
    """TanhGaussianPolicy tail: heads = [mean || log_std] for this row block."""
    A = action_dim
    mean = heads[:, :A]
    log_std = jnp.clip(heads[:, A:2 * A], LOG_SIG_MIN, LOG_SIG_MAX)
    std = jnp.exp(log_std)

    pre_tanh = mean + std * eps                      # rsample
    action = jnp.tanh(pre_tanh)

    # Normal(mean, std).log_prob(pre_tanh) == -0.5*eps^2 - log_std - 0.5*log(2*pi)
    normal_lp = -0.5 * eps * eps - log_std - 0.5 * LOG_2PI
    # stable log(1 - tanh(u)^2) = 2*(log 2 - u - softplus(-2u))   (rlkit correction)
    log1m_tanh2 = 2.0 * (LOG_2 - pre_tanh - jax.nn.softplus(-2.0 * pre_tanh))
    log_prob = jnp.sum(normal_lp - log1m_tanh2, axis=-1, keepdims=True)
    return action, mean, log_std, log_prob


def fused_kernel(x_ref, noise_ref,
                 w1_ref, b1_ref, w2_ref, b2_ref, wh_ref, bh_ref,
                 out_ref, *, action_dim, latent_dim, seq_len, pack):
    """Policy MLP + context-encoder MLP (block-diagonal GEMMs) + VIME-KL reward,
    one row block per grid step, one dense slab store."""
    A, L = action_dim, latent_dim
    x = x_ref[...]                                   # (R, obs_dim + ctx_dim)
    eps = noise_ref[...]                             # (R, A)
    R = x.shape[0]

    # Three block-diagonal GEMMs; columns [:H] carry the policy stream,
    # columns [H:] the encoder stream (weights pre-fused in the wrapper).
    h1 = jnp.maximum(
        jnp.dot(x, w1_ref[...], preferred_element_type=jnp.float32) + b1_ref[...], 0.0)
    h2 = jnp.maximum(
        jnp.dot(h1, w2_ref[...], preferred_element_type=jnp.float32) + b2_ref[...], 0.0)
    heads = jnp.dot(h2, wh_ref[...], preferred_element_type=jnp.float32) + bh_ref[...]

    # ---- policy outputs -------------------------------------------------
    action, mean, log_std, log_prob = _policy_from_heads(heads[:, :2 * A], eps, A)

    # ---- encoder + compute_kl_div_vime ----------------------------------
    enc = heads[:, 2 * A:2 * A + 2 * L]              # (R, 2L)
    z_mean_next = enc[:, :L]
    z_var_next = jax.nn.softplus(enc[:, L:])

    # shift-by-one within each task (XLU sublane roll); rows that start a task
    # (local row % seq_len == 0; row tile is aligned to task boundaries) take
    # the N(0, 1) prior instead of the wrapped-around value.
    z_mean_prev = pltpu.roll(z_mean_next, shift=1, axis=0)
    z_var_prev = pltpu.roll(z_var_next, shift=1, axis=0)
    row = lax.broadcasted_iota(jnp.int32, (R, 1), 0)
    is_first = (row % seq_len) == 0
    z_mean = jnp.where(is_first, 0.0, z_mean_prev)
    z_var = jnp.where(is_first, 1.0, z_var_prev)

    # exact compute_kl_div_vime (divides by the variance, as in the module)
    tem = z_var_next / z_var
    kl = tem * tem - 2.0 * jnp.log(tem) + ((z_mean - z_mean_next) / z_var) ** 2 - 1.0
    rew = 0.5 * jnp.sum(kl, axis=-1, keepdims=True)

    # ---- single lane-dense slab store ------------------------------------
    n_cols = 3 * A + 2
    filler = jnp.zeros((R, pack - n_cols), jnp.float32)
    out_ref[...] = jnp.concatenate(
        [action, mean, log_std, log_prob, rew, filler], axis=1)


def policy_only_kernel(x_ref, noise_ref,
                       w1_ref, b1_ref, w2_ref, b2_ref, wh_ref, bh_ref,
                       out_ref, *, action_dim, pack):
    A = action_dim
    x = x_ref[...]
    eps = noise_ref[...]
    R = x.shape[0]

    h1 = jnp.maximum(
        jnp.dot(x, w1_ref[...], preferred_element_type=jnp.float32) + b1_ref[...], 0.0)
    h2 = jnp.maximum(
        jnp.dot(h1, w2_ref[...], preferred_element_type=jnp.float32) + b2_ref[...], 0.0)
    heads = jnp.dot(h2, wh_ref[...], preferred_element_type=jnp.float32) + bh_ref[...]

    action, mean, log_std, log_prob = _policy_from_heads(heads, eps, A)

    n_cols = 3 * A + 1
    filler = jnp.zeros((R, pack - n_cols), jnp.float32)
    out_ref[...] = jnp.concatenate([action, mean, log_std, log_prob, filler], axis=1)


# ---------------------------------------------------------------------------
# Wrapper
# ---------------------------------------------------------------------------
def _resident_spec(arr):
    # full-array block, constant index_map -> stays resident in VMEM across steps
    # TODO(synk): add pipeline_mode=pl.Buffered(1) here on v7x at large hidden sizes.
    return pl.BlockSpec(arr.shape, lambda i: (0, 0))


def _block_diag(a, b):
    m, n = a.shape
    p, q = b.shape
    top = jnp.concatenate([a, jnp.zeros((m, q), a.dtype)], axis=1)
    bot = jnp.concatenate([jnp.zeros((p, n), b.dtype), b], axis=1)
    return jnp.concatenate([top, bot], axis=0)


def _rows_per_block(total_rows, align, target=256):
    """Largest row tile that (a) is a multiple of `align` (task boundary
    alignment for the shift), (b) divides total_rows, and (c) is a multiple of
    8 or equals total_rows (TPU (8,128) block constraint)."""
    n_units = total_rows // align
    start = max(1, min(target // max(align, 1), n_units))
    for g in range(start, 0, -1):
        r = g * align
        if n_units % g == 0 and (r % 8 == 0 or r == total_rows):
            return r
    return total_rows


def exp_agent_iter_forward(obs, context, policy_params, encoder_params, noise,
                           latent_dim, cal_rew=True):
    """Mirrors ExpAgentIter.forward(obs, context, cal_rew) (forward pass only)."""
    t, b, obs_dim = obs.shape
    A = policy_params["wm"].shape[1]
    rows = t * b
    obs_flat = obs.reshape(rows, obs_dim)
    noise = noise.reshape(rows, A)

    # merged mean||log_std policy head (tiny one-time XLA concat)
    pwh = jnp.concatenate([policy_params["wm"], policy_params["ws"]], axis=1)
    pbh = jnp.concatenate([policy_params["bm"], policy_params["bs"]], axis=1)

    cparams = pltpu.CompilerParams(dimension_semantics=("parallel",))
    # NOTE: at these sizes the default scoped-VMEM limit is ample; set
    # vmem_limit_bytes when scaling hidden sizes / row tiles (esp. v7x, 64 MiB).

    if cal_rew:
        T, S, C = context.shape
        # Original module only requires T*S == t*b for the flattening.
        assert T * S == rows, "context rows must match obs rows (T*S == t*b)"
        ctx_flat = context.reshape(rows, C)
        L = latent_dim

        # Block-diagonal fusion of policy + encoder MLP stacks (built once).
        w1 = _block_diag(policy_params["w1"], encoder_params["w1"])
        b1 = jnp.concatenate([policy_params["b1"], encoder_params["b1"]], axis=1)
        w2 = _block_diag(policy_params["w2"], encoder_params["w2"])
        b2 = jnp.concatenate([policy_params["b2"], encoder_params["b2"]], axis=1)
        wh = _block_diag(pwh, encoder_params["wo"])
        bh = jnp.concatenate([pbh, encoder_params["bo"]], axis=1)
        x = jnp.concatenate([obs_flat, ctx_flat], axis=1)       # (rows, obs+ctx)

        n_cols = 3 * A + 2
        pack = pl.cdiv(n_cols, 128) * 128                        # lane-dense slab
        R = _rows_per_block(rows, S)                             # task-aligned row tile
        weights = (w1, b1, w2, b2, wh, bh)

        slab = pl.pallas_call(
            partial(fused_kernel, action_dim=A, latent_dim=L, seq_len=S, pack=pack),
            out_shape=jax.ShapeDtypeStruct((rows, pack), jnp.float32),
            grid=(rows // R,),
            in_specs=[pl.BlockSpec((R, x.shape[1]), lambda i: (i, 0)),
                      pl.BlockSpec((R, A), lambda i: (i, 0))]
                     + [_resident_spec(w) for w in weights],
            out_specs=pl.BlockSpec((R, pack), lambda i: (i, 0)),
            compiler_params=cparams,
        )(x, noise, *weights)
        rew = jax.lax.stop_gradient(slab[:, 3 * A + 1:3 * A + 2])   # rew.detach()
    else:
        n_cols = 3 * A + 1
        pack = pl.cdiv(n_cols, 128) * 128
        R = _rows_per_block(rows, 1)
        weights = (policy_params["w1"], policy_params["b1"],
                   policy_params["w2"], policy_params["b2"], pwh, pbh)

        slab = pl.pallas_call(
            partial(policy_only_kernel, action_dim=A, pack=pack),
            out_shape=jax.ShapeDtypeStruct((rows, pack), jnp.float32),
            grid=(rows // R,),
            in_specs=[pl.BlockSpec((R, obs_dim), lambda i: (i, 0)),
                      pl.BlockSpec((R, A), lambda i: (i, 0))]
                     + [_resident_spec(w) for w in weights],
            out_specs=pl.BlockSpec((R, pack), lambda i: (i, 0)),
            compiler_params=cparams,
        )(obs_flat, noise, *weights)
        rew = None

    policy_outputs = (slab[:, 0:A],                 # action
                      slab[:, A:2 * A],             # mean
                      slab[:, 2 * A:3 * A],         # log_std
                      slab[:, 3 * A:3 * A + 1])     # log_prob
    return policy_outputs, rew


# ---------------------------------------------------------------------------
# Deterministic parameter init
# ---------------------------------------------------------------------------
def _linear(key, fan_in, fan_out):
    kw, kb = jax.random.split(key)
    bound = 1.0 / math.sqrt(fan_in)
    w = jax.random.uniform(kw, (fan_in, fan_out), jnp.float32, -bound, bound)
    b = jax.random.uniform(kb, (1, fan_out), jnp.float32, -bound, bound)
    return w, b


def init_policy_params(key, obs_dim, hidden, action_dim):
    k1, k2, k3, k4 = jax.random.split(key, 4)
    w1, b1 = _linear(k1, obs_dim, hidden)
    w2, b2 = _linear(k2, hidden, hidden)
    wm, bm = _linear(k3, hidden, action_dim)
    ws, bs = _linear(k4, hidden, action_dim)
    return dict(w1=w1, b1=b1, w2=w2, b2=b2, wm=wm, bm=bm, ws=ws, bs=bs)


def init_encoder_params(key, ctx_dim, hidden, latent_dim):
    k1, k2, k3 = jax.random.split(key, 3)
    w1, b1 = _linear(k1, ctx_dim, hidden)
    w2, b2 = _linear(k2, hidden, hidden)
    wo, bo = _linear(k3, hidden, 2 * latent_dim)   # context_encoder.output_size
    return dict(w1=w1, b1=b1, w2=w2, b2=b2, wo=wo, bo=bo)


# ---------------------------------------------------------------------------
if __name__ == "__main__":
    # TODO(synk): policy / context_encoder are constructor-injected modules; they
    # are synthesized here as deterministic MLPs (recurrent/SNAIL encoder state
    # and the stateful clear_z / infer_posterior machinery are not modeled).
    t, b = 2, 8                          # t tasks, b steps per task
    obs_dim, action_dim = 11, 4
    latent_dim, hidden = 5, 32
    ctx_dim = obs_dim + action_dim + 1   # (o, a, r), use_next_obs_in_context=False
    T, S = t, b                          # context: (num_tasks, seq_len, ctx_dim)

    root = jax.random.PRNGKey(0)
    k_obs, k_ctx, k_noise, k_pol, k_enc = jax.random.split(root, 5)

    obs = jax.random.normal(k_obs, (t, b, obs_dim), jnp.float32)
    context = jax.random.normal(k_ctx, (T, S, ctx_dim), jnp.float32)
    noise = jax.random.normal(k_noise, (t * b, action_dim), jnp.float32)  # rsample eps

    policy_params = init_policy_params(k_pol, obs_dim, hidden, action_dim)
    encoder_params = init_encoder_params(k_enc, ctx_dim, hidden, latent_dim)

    (action, mean, log_std, log_prob), rew = exp_agent_iter_forward(
        obs, context, policy_params, encoder_params, noise, latent_dim, cal_rew=True)
    jax.block_until_ready((action, mean, log_std, log_prob, rew))

    # also exercise the cal_rew=False branch once
    (a2, m2, s2, lp2), rew2 = exp_agent_iter_forward(
        obs, context, policy_params, encoder_params, noise, latent_dim, cal_rew=False)
    jax.block_until_ready((a2, m2, s2, lp2))

    # shape / sanity checks
    assert action.shape == (t * b, action_dim)
    assert mean.shape == (t * b, action_dim)
    assert log_std.shape == (t * b, action_dim)
    assert log_prob.shape == (t * b, 1)
    assert rew.shape == (t * b, 1)
    assert rew2 is None and a2.shape == action.shape
    assert bool(jnp.all(jnp.isfinite(action)))
    assert bool(jnp.all(jnp.isfinite(mean)))
    assert bool(jnp.all(jnp.isfinite(log_std)))
    assert bool(jnp.all(jnp.isfinite(log_prob)))
    assert bool(jnp.all(jnp.isfinite(rew)))
    assert bool(jnp.all(jnp.abs(action) <= 1.0))           # tanh-squashed
    assert bool(jnp.all(log_std <= LOG_SIG_MAX + 1e-5))
    assert bool(jnp.all(log_std >= LOG_SIG_MIN - 1e-5))
    assert bool(jnp.all(rew >= -1e-4))                      # VIME KL is non-negative
    print("KERNEL_OK")
</pallas_src>

<mosaic_0001>
module attributes {stable_mosaic.version = 11 : i64} {
  func.func @fused_kernel(%arg0: i32, %arg1: memref<16x27xf32, #tpu.memory_space<vmem>>, %arg2: memref<16x4xf32, #tpu.memory_space<vmem>>, %arg3: memref<27x64xf32, #tpu.memory_space<vmem>>, %arg4: memref<1x64xf32, #tpu.memory_space<vmem>>, %arg5: memref<64x64xf32, #tpu.memory_space<vmem>>, %arg6: memref<1x64xf32, #tpu.memory_space<vmem>>, %arg7: memref<64x18xf32, #tpu.memory_space<vmem>>, %arg8: memref<1x18xf32, #tpu.memory_space<vmem>>, %arg9: memref<16x128xf32, #tpu.memory_space<vmem>>) attributes {dimension_semantics = [#tpu.dimension_semantics<parallel>], iteration_bounds = array<i64: 1>, scalar_prefetch = 0 : i64, scratch_operands = 0 : i64, tpu.core_type = #tpu.core_type<tc>, window_params = [{transform_indices = @transform_0, window_bounds = array<i64: 16, 27>}, {transform_indices = @transform_1, window_bounds = array<i64: 16, 4>}, {pipeline_mode = #tpu.pipeline_mode<synchronous>, transform_indices = @transform_2, window_bounds = array<i64: 27, 64>}, {pipeline_mode = #tpu.pipeline_mode<synchronous>, transform_indices = @transform_3, window_bounds = array<i64: 1, 64>}, {pipeline_mode = #tpu.pipeline_mode<synchronous>, transform_indices = @transform_4, window_bounds = array<i64: 64, 64>}, {pipeline_mode = #tpu.pipeline_mode<synchronous>, transform_indices = @transform_5, window_bounds = array<i64: 1, 64>}, {pipeline_mode = #tpu.pipeline_mode<synchronous>, transform_indices = @transform_6, window_bounds = array<i64: 64, 18>}, {pipeline_mode = #tpu.pipeline_mode<synchronous>, transform_indices = @transform_7, window_bounds = array<i64: 1, 18>}, {transform_indices = @transform_8, window_bounds = array<i64: 16, 128>}]} {
    %c0 = arith.constant 0 : index
    %c0_0 = arith.constant 0 : index
    %0 = vector.load %arg1[%c0, %c0_0] : memref<16x27xf32, #tpu.memory_space<vmem>>, vector<16x27xf32>
    %c0_1 = arith.constant 0 : index
    %c0_2 = arith.constant 0 : index
    %1 = vector.load %arg2[%c0_1, %c0_2] : memref<16x4xf32, #tpu.memory_space<vmem>>, vector<16x4xf32>
    %c0_3 = arith.constant 0 : index
    %c0_4 = arith.constant 0 : index
    %2 = vector.load %arg3[%c0_3, %c0_4] : memref<27x64xf32, #tpu.memory_space<vmem>>, vector<27x64xf32>
    %cst = arith.constant dense<0.000000e+00> : vector<16x64xf32>
    %3 = tpu.matmul %0, %2, %cst {dimension_numbers = #tpu.dot_dimension_numbers<[1], [0], [0], [1], [0, 0, 1, 1], [], []>} : vector<16x27xf32>, vector<27x64xf32>, vector<16x64xf32> -> vector<16x64xf32>
    %c0_5 = arith.constant 0 : index
    %c0_6 = arith.constant 0 : index
    %4 = vector.load %arg4[%c0_5, %c0_6] : memref<1x64xf32, #tpu.memory_space<vmem>>, vector<1x64xf32>
    %5 = vector.broadcast %4 : vector<1x64xf32> to vector<16x64xf32>
    %6 = arith.addf %3, %5 : vector<16x64xf32>
    %cst_7 = arith.constant 0.000000e+00 : f32
    %7 = vector.broadcast %cst_7 : f32 to vector<16x64xf32>
    %8 = arith.maximumf %6, %7 : vector<16x64xf32>
    %c0_8 = arith.constant 0 : index
    %c0_9 = arith.constant 0 : index
    %9 = vector.load %arg5[%c0_8, %c0_9] : memref<64x64xf32, #tpu.memory_space<vmem>>, vector<64x64xf32>
    %cst_10 = arith.constant dense<0.000000e+00> : vector<16x64xf32>
    %10 = tpu.matmul %8, %9, %cst_10 {dimension_numbers = #tpu.dot_dimension_numbers<[1], [0], [0], [1], [0, 0, 1, 1], [], []>} : vector<16x64xf32>, vector<64x64xf32>, vector<16x64xf32> -> vector<16x64xf32>
    %c0_11 = arith.constant 0 : index
    %c0_12 = arith.constant 0 : index
    %11 = vector.load %arg6[%c0_11, %c0_12] : memref<1x64xf32, #tpu.memory_space<vmem>>, vector<1x64xf32>
    %12 = vector.broadcast %11 : vector<1x64xf32> to vector<16x64xf32>
    %13 = arith.addf %10, %12 : vector<16x64xf32>
    %cst_13 = arith.constant 0.000000e+00 : f32
    %14 = vector.broadcast %cst_13 : f32 to vector<16x64xf32>
    %15 = arith.maximumf %13, %14 : vector<16x64xf32>
    %c0_14 = arith.constant 0 : index
    %c0_15 = arith.constant 0 : index
    %16 = vector.load %arg7[%c0_14, %c0_15] : memref<64x18xf32, #tpu.memory_space<vmem>>, vector<64x18xf32>
    %cst_16 = arith.constant dense<0.000000e+00> : vector<16x18xf32>
    %17 = tpu.matmul %15, %16, %cst_16 {dimension_numbers = #tpu.dot_dimension_numbers<[1], [0], [0], [1], [0, 0, 1, 1], [], []>} : vector<16x64xf32>, vector<64x18xf32>, vector<16x18xf32> -> vector<16x18xf32>
    %c0_17 = arith.constant 0 : index
    %c0_18 = arith.constant 0 : index
    %18 = vector.load %arg8[%c0_17, %c0_18] : memref<1x18xf32, #tpu.memory_space<vmem>>, vector<1x18xf32>
    %19 = vector.broadcast %18 : vector<1x18xf32> to vector<16x18xf32>
    %20 = arith.addf %17, %19 : vector<16x18xf32>
    %21 = vector.extract_strided_slice %20 {offsets = [0, 0], sizes = [16, 8], strides = [1, 1]} : vector<16x18xf32> to vector<16x8xf32>
    %22 = vector.extract_strided_slice %21 {offsets = [0, 0], sizes = [16, 4], strides = [1, 1]} : vector<16x8xf32> to vector<16x4xf32>
    %23 = vector.extract_strided_slice %21 {offsets = [0, 4], sizes = [16, 4], strides = [1, 1]} : vector<16x8xf32> to vector<16x4xf32>
    %cst_19 = arith.constant -2.000000e+01 : f32
    %cst_20 = arith.constant 2.000000e+00 : f32
    %24 = vector.broadcast %cst_19 : f32 to vector<16x4xf32>
    %25 = arith.maximumf %24, %23 : vector<16x4xf32>
    %26 = vector.broadcast %cst_20 : f32 to vector<16x4xf32>
    %27 = arith.minimumf %26, %25 : vector<16x4xf32>
    %28 = math.exp %27 : vector<16x4xf32>
    %29 = arith.mulf %28, %1 : vector<16x4xf32>
    %30 = arith.addf %22, %29 : vector<16x4xf32>
    %31 = math.tanh %30 : vector<16x4xf32>
    %cst_21 = arith.constant -5.000000e-01 : f32
    %32 = vector.broadcast %cst_21 : f32 to vector<16x4xf32>
    %33 = arith.mulf %32, %1 : vector<16x4xf32>
    %34 = arith.mulf %33, %1 : vector<16x4xf32>
    %35 = arith.subf %34, %27 : vector<16x4xf32>
    %cst_22 = arith.constant 0.918938517 : f32
    %36 = vector.broadcast %cst_22 : f32 to vector<16x4xf32>
    %37 = arith.subf %35, %36 : vector<16x4xf32>
    %cst_23 = arith.constant 0.693147182 : f32
    %38 = vector.broadcast %cst_23 : f32 to vector<16x4xf32>
    %39 = arith.subf %38, %30 : vector<16x4xf32>
    %cst_24 = arith.constant -2.000000e+00 : f32
    %40 = vector.broadcast %cst_24 : f32 to vector<16x4xf32>
    %41 = arith.mulf %40, %30 : vector<16x4xf32>
    %cst_25 = arith.constant 0.000000e+00 : f32
    %42 = vector.broadcast %cst_25 : f32 to vector<16x4xf32>
    %43 = arith.maximumf %41, %42 : vector<16x4xf32>
    %44 = vector.broadcast %cst_25 : f32 to vector<16x4xf32>
    %45 = arith.subf %41, %44 : vector<16x4xf32>
    %46 = arith.cmpf one, %45, %45 : vector<16x4xf32>
    %47 = vector.broadcast %cst_25 : f32 to vector<16x4xf32>
    %48 = arith.addf %41, %47 : vector<16x4xf32>
    %49 = math.absf %45 : vector<16x4xf32>
    %cst_26 = arith.constant 0.000000e+00 : f32
    %50 = vector.broadcast %cst_26 : f32 to vector<16x4xf32>
    %51 = arith.subf %50, %49 : vector<16x4xf32>
    %52 = math.exp %51 : vector<16x4xf32>
    %53 = math.log1p %52 : vector<16x4xf32>
    %54 = arith.addf %43, %53 : vector<16x4xf32>
    %55 = arith.select %46, %48, %54 : vector<16x4xi1>, vector<16x4xf32>
    %56 = arith.subf %39, %55 : vector<16x4xf32>
    %cst_27 = arith.constant 2.000000e+00 : f32
    %57 = vector.broadcast %cst_27 : f32 to vector<16x4xf32>
    %58 = arith.mulf %57, %56 : vector<16x4xf32>
    %59 = arith.subf %37, %58 : vector<16x4xf32>
    %cst_28 = arith.constant dense<0.000000e+00> : vector<16xf32>
    %60 = vector.multi_reduction <add>, %59, %cst_28 [1] : vector<16x4xf32> to vector<16xf32>
    %61 = vector.shape_cast %60 : vector<16xf32> to vector<16x1xf32>
    %62 = vector.extract_strided_slice %20 {offsets = [0, 8], sizes = [16, 10], strides = [1, 1]} : vector<16x18xf32> to vector<16x10xf32>
    %63 = vector.extract_strided_slice %62 {offsets = [0, 0], sizes = [16, 5], strides = [1, 1]} : vector<16x10xf32> to vector<16x5xf32>
    %64 = vector.extract_strided_slice %62 {offsets = [0, 5], sizes = [16, 5], strides = [1, 1]} : vector<16x10xf32> to vector<16x5xf32>
    %cst_29 = arith.constant 0.000000e+00 : f32
    %65 = vector.broadcast %cst_29 : f32 to vector<16x5xf32>
    %66 = arith.maximumf %64, %65 : vector<16x5xf32>
    %67 = vector.broadcast %cst_29 : f32 to vector<16x5xf32>
    %68 = arith.subf %64, %67 : vector<16x5xf32>
    %69 = arith.cmpf one, %68, %68 : vector<16x5xf32>
    %70 = vector.broadcast %cst_29 : f32 to vector<16x5xf32>
    %71 = arith.addf %64, %70 : vector<16x5xf32>
    %72 = math.absf %68 : vector<16x5xf32>
    %cst_30 = arith.constant 0.000000e+00 : f32
    %73 = vector.broadcast %cst_30 : f32 to vector<16x5xf32>
    %74 = arith.subf %73, %72 : vector<16x5xf32>
    %75 = math.exp %74 : vector<16x5xf32>
    %76 = math.log1p %75 : vector<16x5xf32>
    %77 = arith.addf %66, %76 : vector<16x5xf32>
    %78 = arith.select %69, %71, %77 : vector<16x5xi1>, vector<16x5xf32>
    %c1_i32 = arith.constant 1 : i32
    %79 = tpu.dynamic_rotate %63 by %c1_i32 dim 0 : vector<16x5xf32>, i32 -> vector<16x5xf32>
    %c1_i32_31 = arith.constant 1 : i32
    %80 = tpu.dynamic_rotate %78 by %c1_i32_31 dim 0 : vector<16x5xf32>, i32 -> vector<16x5xf32>
    %81 = tpu.iota {dimensions = array<i32: 0>} : vector<16x1xi32>
    %c8_i32 = arith.constant 8 : i32
    %c0_i32 = arith.constant 0 : i32
    %82 = arith.cmpi eq, %c8_i32, %c0_i32 : i32
    %c1_i32_32 = arith.constant 1 : i32
    %83 = arith.select %82, %c1_i32_32, %c8_i32 : i32
    %84 = vector.broadcast %83 : i32 to vector<16x1xi32>
    %85 = arith.remsi %81, %84 : vector<16x1xi32>
    %c0_i32_33 = arith.constant 0 : i32
    %86 = vector.broadcast %c0_i32_33 : i32 to vector<16x1xi32>
    %87 = arith.cmpi ne, %85, %86 : vector<16x1xi32>
    %c0_i32_34 = arith.constant 0 : i32
    %88 = vector.broadcast %c0_i32_34 : i32 to vector<16x1xi32>
    %89 = arith.cmpi slt, %85, %88 : vector<16x1xi32>
    %c0_i32_35 = arith.constant 0 : i32
    %90 = arith.cmpi slt, %83, %c0_i32_35 : i32
    %91 = vector.broadcast %90 : i1 to vector<16x1xi1>
    %92 = vector.broadcast %91 : vector<16x1xi1> to vector<16x1xi1>
    %93 = arith.xori %89, %92 : vector<16x1xi1>
    %94 = arith.andi %93, %87 : vector<16x1xi1>
    %95 = vector.broadcast %83 : i32 to vector<16x1xi32>
    %96 = arith.addi %85, %95 : vector<16x1xi32>
    %97 = arith.select %94, %96, %85 : vector<16x1xi1>, vector<16x1xi32>
    %c0_i32_36 = arith.constant 0 : i32
    %98 = vector.broadcast %c0_i32_36 : i32 to vector<16x1xi32>
    %99 = arith.cmpi eq, %97, %98 : vector<16x1xi32>
    %cst_37 = arith.constant 0.000000e+00 : f32
    %100 = vector.shape_cast %99 : vector<16x1xi1> to vector<16x1xi1>
    %101 = vector.broadcast %100 : vector<16x1xi1> to vector<16x5xi1>
    %102 = vector.broadcast %cst_37 : f32 to vector<16x5xf32>
    %103 = arith.select %101, %102, %79 : vector<16x5xi1>, vector<16x5xf32>
    %cst_38 = arith.constant 1.000000e+00 : f32
    %104 = vector.shape_cast %99 : vector<16x1xi1> to vector<16x1xi1>
    %105 = vector.broadcast %104 : vector<16x1xi1> to vector<16x5xi1>
    %106 = vector.broadcast %cst_38 : f32 to vector<16x5xf32>
    %107 = arith.select %105, %106, %80 : vector<16x5xi1>, vector<16x5xf32>
    %108 = arith.divf %78, %107 : vector<16x5xf32>
    %109 = arith.mulf %108, %108 : vector<16x5xf32>
    %110 = math.log %108 : vector<16x5xf32>
    %cst_39 = arith.constant 2.000000e+00 : f32
    %111 = vector.broadcast %cst_39 : f32 to vector<16x5xf32>
    %112 = arith.mulf %111, %110 : vector<16x5xf32>
    %113 = arith.subf %109, %112 : vector<16x5xf32>
    %114 = arith.subf %103, %63 : vector<16x5xf32>
    %115 = arith.divf %114, %107 : vector<16x5xf32>
    %116 = arith.mulf %115, %115 : vector<16x5xf32>
    %117 = arith.addf %113, %116 : vector<16x5xf32>
    %cst_40 = arith.constant 1.000000e+00 : f32
    %118 = vector.broadcast %cst_40 : f32 to vector<16x5xf32>
    %119 = arith.subf %117, %118 : vector<16x5xf32>
    %cst_41 = arith.constant dense<0.000000e+00> : vector<16xf32>
    %120 = vector.multi_reduction <add>, %119, %cst_41 [1] : vector<16x5xf32> to vector<16xf32>
    %121 = vector.shape_cast %120 : vector<16xf32> to vector<16x1xf32>
    %cst_42 = arith.constant 5.000000e-01 : f32
    %122 = vector.broadcast %cst_42 : f32 to vector<16x1xf32>
    %123 = arith.mulf %122, %121 : vector<16x1xf32>
    %cst_43 = arith.constant 0.000000e+00 : f32
    %124 = vector.broadcast %cst_43 : f32 to vector<16x114xf32>
    %125 = tpu.concatenate %31, %22, %27, %61, %123, %124 in 1 : vector<16x4xf32>, vector<16x4xf32>, vector<16x4xf32>, vector<16x1xf32>, vector<16x1xf32>, vector<16x114xf32> -> vector<16x128xf32>
    %c0_44 = arith.constant 0 : index
    %c0_45 = arith.constant 0 : index
    %126 = vector.load %arg9[%c0_44, %c0_45] : memref<16x128xf32, #tpu.memory_space<vmem>>, vector<16x128xf32>
    tpu.vector_store %arg9[%c0_44, %c0_45], %125 {strides = array<i32>} : memref<16x128xf32, #tpu.memory_space<vmem>>, vector<16x128xf32>,
    return
  }
  func.func @transform_0(%arg0: i32) -> (i32, i32) {
    %c0_i32 = arith.constant 0 : i32
    %c0_i32_0 = arith.constant 0 : i32
    return %arg0, %c0_i32 : i32, i32
  }
  func.func @transform_1(%arg0: i32) -> (i32, i32) {
    %c0_i32 = arith.constant 0 : i32
    %c0_i32_0 = arith.constant 0 : i32
    return %arg0, %c0_i32 : i32, i32
  }
  func.func @transform_2(%arg0: i32) -> (i32, i32) {
    %c0_i32 = arith.constant 0 : i32
    %c0_i32_0 = arith.constant 0 : i32
    %c0_i32_1 = arith.constant 0 : i32
    return %c0_i32, %c0_i32_0 : i32, i32
  }
  func.func @transform_3(%arg0: i32) -> (i32, i32) {
    %c0_i32 = arith.constant 0 : i32
    %c0_i32_0 = arith.constant 0 : i32
    %c0_i32_1 = arith.constant 0 : i32
    return %c0_i32, %c0_i32_0 : i32, i32
  }
  func.func @transform_4(%arg0: i32) -> (i32, i32) {
    %c0_i32 = arith.constant 0 : i32
    %c0_i32_0 = arith.constant 0 : i32
    %c0_i32_1 = arith.constant 0 : i32
    return %c0_i32, %c0_i32_0 : i32, i32
  }
  func.func @transform_5(%arg0: i32) -> (i32, i32) {
    %c0_i32 = arith.constant 0 : i32
    %c0_i32_0 = arith.constant 0 : i32
    %c0_i32_1 = arith.constant 0 : i32
    return %c0_i32, %c0_i32_0 : i32, i32
  }
  func.func @transform_6(%arg0: i32) -> (i32, i32) {
    %c0_i32 = arith.constant 0 : i32
    %c0_i32_0 = arith.constant 0 : i32
    %c0_i32_1 = arith.constant 0 : i32
    return %c0_i32, %c0_i32_0 : i32, i32
  }
  func.func @transform_7(%arg0: i32) -> (i32, i32) {
    %c0_i32 = arith.constant 0 : i32
    %c0_i32_0 = arith.constant 0 : i32
    %c0_i32_1 = arith.constant 0 : i32
    return %c0_i32, %c0_i32_0 : i32, i32
  }
  func.func @transform_8(%arg0: i32) -> (i32, i32) {
    %c0_i32 = arith.constant 0 : i32
    %c0_i32_0 = arith.constant 0 : i32
    return %arg0, %c0_i32 : i32, i32
  }
}

</mosaic_0001>

<llo_original>
// kernel: tpu_custom_call.1
$region0: #{tpu_custom_call.1}
  #allocation0 [shape = 'u32[]', space=smem, size = 0x4, offset = 0x4, fixed_abs, tag = 'smem constant byte address 0x4 - core index']
  #allocation1 [shape = 'u32[72,128]{1,0:T(1,128)}', space=vmem, size = 0x9000, scoped, tag = 'internal scratch']
  %s0 = inlined_call_operand.vmem [shape: f32[16,27], index: 0, kind: input, shape index: {}]
  %s1 = inlined_call_operand.vmem [shape: f32[16,4], index: 1, kind: input, shape index: {}]
  %s2 = inlined_call_operand.hbm [shape: f32[27,64], index: 2, kind: input, shape index: {}]
  %s3 = inlined_call_operand.vmem [shape: f32[1,64], index: 3, kind: input, shape index: {}]
  %s4 = inlined_call_operand.vmem [shape: f32[64,64], index: 4, kind: input, shape index: {}]
  %s5 = inlined_call_operand.vmem [shape: f32[1,64], index: 5, kind: input, shape index: {}]
  %s6 = inlined_call_operand.vmem [shape: f32[64,18], index: 6, kind: input, shape index: {}]
  %s7 = inlined_call_operand.vmem [shape: f32[1,18], index: 7, kind: input, shape index: {}]
  %s8 = inlined_call_operand.hbm [shape: f32[16,128], index: 8, kind: output, shape index: {}]
  %s9 = sld [smem:[#allocation0]]
  $region46: #{tpu_custom_call.1} parent=0
    _
  %s11 = ssub.s32 1, %s9
  %s12 = scalar_select 0, %s11, %s9
  $region1: #{tpu_custom_call.1} parent=0
    #allocation2 [shape = 'u8[16384]{0}', space=vmem, size = 0x4000, scoped, tag = 'input window, operand 2, single buffered']
    #allocation3 [shape = 's32[1]{0}', space=sflag, size = 0x4, scoped, tag = 'scoped memory for tpu_custom_call.1']
    #allocation4 [shape = 's32[1]{0}', space=sflag, size = 0x4, scoped, tag = 'scoped memory for tpu_custom_call.1']
    #allocation5 [shape = 'u8[8192]{0}', space=vmem, size = 0x2000, scoped, tag = 'output window, operand 0, single buffered']
    %13 = vsyncpa [#allocation3], 0
    %14 = vsyncpa [#allocation4], 0
    // Predicated region
    $region2: #{tpu_custom_call.1} parent=1 // pred_check
      _
    $region3: #{tpu_custom_call.1} parent=1 // pred_check_branch
      %16 = sbr.rel (0) target = $region5
    $region4: #{tpu_custom_call.1} parent=1 // pred_region
      _
    $region5: #{tpu_custom_call.1} parent=1 // pred_fallthru
      _
    // Predicated region
    $region6: #{tpu_custom_call.1} parent=1 // pred_check
      _
    $region7: #{tpu_custom_call.1} parent=1 // pred_check_branch
      %18 = sbr.rel (0) target = $region9
    $region8: #{tpu_custom_call.1} parent=1 // pred_region
      _
    $region9: #{tpu_custom_call.1} parent=1 // pred_fallthru
      _
    // Predicated region
    $region10: #{tpu_custom_call.1} parent=1 // pred_check
      _
    $region11: #{tpu_custom_call.1} parent=1 // pred_check_branch
      %20 = sbr.rel (0) target = $region13
    $region12: #{tpu_custom_call.1} parent=1 // pred_region
      %22 = vsyncadd [#allocation3], 0
      %s23 = sshll.u32 %s2, 4
      %s24 = int_to_ptr.hbm [resolvable:$true] %s23
      %s25 = sshll.u32 [#allocation2], 4
      %s26 = int_to_ptr.vmem [resolvable:$true] %s25
      %31 = dma.hbm_to_vmem [thread:$0]  %s24, 512, %s26, [#allocation3], 128, 128, 8
    $region13: #{tpu_custom_call.1} parent=1 // pred_fallthru
      _
    // Predicated region
    $region14: #{tpu_custom_call.1} parent=1 // pred_check
      _
    $region15: #{tpu_custom_call.1} parent=1 // pred_check_branch
      %33 = sbr.rel (0) target = $region17
    $region16: #{tpu_custom_call.1} parent=1 // pred_region
      _
    $region17: #{tpu_custom_call.1} parent=1 // pred_fallthru
      _
    // Predicated region
    $region18: #{tpu_custom_call.1} parent=1 // pred_check
      _
    $region19: #{tpu_custom_call.1} parent=1 // pred_check_branch
      %35 = sbr.rel (0) target = $region21
    $region20: #{tpu_custom_call.1} parent=1 // pred_region
      _
    $region21: #{tpu_custom_call.1} parent=1 // pred_fallthru
      _
    // Predicated region
    $region22: #{tpu_custom_call.1} parent=1 // pred_check
      _
    $region23: #{tpu_custom_call.1} parent=1 // pred_check_branch
      %37 = sbr.rel (0) target = $region25
    $region24: #{tpu_custom_call.1} parent=1 // pred_region
      _
    $region25: #{tpu_custom_call.1} parent=1 // pred_fallthru
      _
    // Predicated region
    $region26: #{tpu_custom_call.1} parent=1 // pred_check
      _
    $region27: #{tpu_custom_call.1} parent=1 // pred_check_branch
      %39 = sbr.rel (0) target = $region29
    $region28: #{tpu_custom_call.1} parent=1 // pred_region
      _
    $region29: #{tpu_custom_call.1} parent=1 // pred_fallthru
      _
    // Predicated region
    $region30: #{tpu_custom_call.1} parent=1 // pred_check
      _
    $region31: #{tpu_custom_call.1} parent=1 // pred_check_branch
      %41 = sbr.rel (0) target = $region33
    $region32: #{tpu_custom_call.1} parent=1 // pred_region
      _
    $region33: #{tpu_custom_call.1} parent=1 // pred_fallthru
      _
    // Predicated region
    $region34: #{tpu_custom_call.1} parent=1 // pred_check
      _
    $region35: #{tpu_custom_call.1} parent=1 // pred_check_branch
      %43 = sbr.rel (0) target = $region37
    $region36: #{tpu_custom_call.1} parent=1 // pred_region
      %45 = dma.done [#allocation3], 512
    $region37: #{tpu_custom_call.1} parent=1 // pred_fallthru
      _
    %v46 = vld [vmem:[%s0] sm:$0xff]
    %v47 = vld [vmem:[%s0 + $0x8] sm:$0xff]
    %v48 = vld [vmem:[%s1] sm:$0xff]
    %v49 = vld [vmem:[%s1 + $0x8] sm:$0xff]
    %v50 = vld [vmem:[#allocation2] sm:$0xff]
    %v51 = vld [vmem:[#allocation2 + $0x8] sm:$0xff]
    %v52 = vld [vmem:[#allocation2 + $0x10] sm:$0xff]
    %v53 = vld [vmem:[#allocation2 + $0x18] sm:$0x7]
    %v54 = vld [vmem:[%s3] sm:$0x1]
    %v56 = vperm.slane %v54, 0
    %vm58 = vcmask 220160
    %v60 = vsel %vm58, %v46, 0
    %v63 = vsel %vm58, %v47, 0
    %vm65 = vcmask 1042432
    %v67 = vsel %vm65, %v53, 0
    %69 = vmatpush.msra.mxu0 0.0
    %70 = vmatpush.msra.mxu0 0.0
    %71 = vmatpush.msra.mxu0 0.0
    %72 = vmatpush.msra.mxu0 0.0
    %73 = vmatpush.msra.mxu0 0.0
    %74 = vmatpush.msra.mxu0 0.0
    %75 = vmatpush.msra.mxu0 0.0
    %76 = vmatpush.msra.mxu0 0.0
    %77 = vmatpush.msra.mxu0 0.0
    %78 = vmatpush.msra.mxu0 0.0
    %79 = vmatpush.msra.mxu0 0.0
    %80 = vmatpush.msra.mxu0 0.0
    %81 = vmatpush.msra.mxu0 %v67
    %82 = vmatpush.msra.mxu0 %v52
    %83 = vmatpush.msra.mxu0 %v51
    %84 = vmatpush.msra.mxu0 %v50
    %85 = vmatmul.f32.gmra.mxu0 %v60
    %v86 = vpop.f32.mrf.mxu0
    %v87 = vadd.f32 %v56, %v86
    %88 = vmatmul.f32.gmra.mxu0 %v63
    %v89 = vpop.f32.mrf.mxu0
    %v90 = vadd.f32 %v56, %v89
    %91 = vdwg.mxu0
    %v92 = vmax.f32 %v87, 0.0
    %v93 = vmax.f32 %v90, 0.0
    %v94 = vld [vmem:[%s4] sm:$0xff]
    %v95 = vld [vmem:[%s4 + $0x8] sm:$0xff]
    %v96 = vld [vmem:[%s4 + $0x10] sm:$0xff]
    %v97 = vld [vmem:[%s4 + $0x18] sm:$0xff]
    %v98 = vld [vmem:[%s4 + $0x20] sm:$0xff]
    %v99 = vld [vmem:[%s4 + $0x28] sm:$0xff]
    %v100 = vld [vmem:[%s4 + $0x30] sm:$0xff]
    %v101 = vld [vmem:[%s4 + $0x38] sm:$0xff]
    %v102 = vld [vmem:[%s5] sm:$0x1]
    %v104 = vperm.slane %v102, 0
    %vm106 = vcmask 523264
    %v108 = vsel %vm106, %v92, 0
    %v111 = vsel %vm106, %v93, 0
    %113 = vmatpush.msra.mxu0 0.0
    %114 = vmatpush.msra.mxu0 0.0
    %115 = vmatpush.msra.mxu0 0.0
    %116 = vmatpush.msra.mxu0 0.0
    %117 = vmatpush.msra.mxu0 0.0
    %118 = vmatpush.msra.mxu0 0.0
    %119 = vmatpush.msra.mxu0 0.0
    %120 = vmatpush.msra.mxu0 0.0
    %121 = vmatpush.msra.mxu0 %v101
    %122 = vmatpush.msra.mxu0 %v100
    %123 = vmatpush.msra.mxu0 %v99
    %124 = vmatpush.msra.mxu0 %v98
    %125 = vmatpush.msra.mxu0 %v97
    %126 = vmatpush.msra.mxu0 %v96
    %127 = vmatpush.msra.mxu0 %v95
    %128 = vmatpush.msra.mxu0 %v94
    %129 = vmatmul.f32.gmra.mxu0 %v108
    %v130 = vpop.f32.mrf.mxu0
    %v131 = vadd.f32 %v104, %v130
    %132 = vmatmul.f32.gmra.mxu0 %v111
    %v133 = vpop.f32.mrf.mxu0
    %v134 = vadd.f32 %v104, %v133
    %135 = vdwg.mxu0
    %v136 = vmax.f32 %v131, 0.0
    %v137 = vmax.f32 %v134, 0.0
    %v138 = vld [vmem:[%s6] sm:$0xff]
    %v139 = vld [vmem:[%s6 + $0x8] sm:$0xff]
    %v140 = vld [vmem:[%s6 + $0x10] sm:$0xff]
    %v141 = vld [vmem:[%s6 + $0x18] sm:$0xff]
    %v142 = vld [vmem:[%s6 + $0x20] sm:$0xff]
    %v143 = vld [vmem:[%s6 + $0x28] sm:$0xff]
    %v144 = vld [vmem:[%s6 + $0x30] sm:$0xff]
    %v145 = vld [vmem:[%s6 + $0x38] sm:$0xff]
    %v146 = vld [vmem:[%s7] sm:$0x1]
    %v148 = vperm.slane %v146, 0
    %v151 = vsel %vm106, %v136, 0
    %v154 = vsel %vm106, %v137, 0
    %156 = vmatpush.msra.mxu0 0.0
    %157 = vmatpush.msra.mxu0 0.0
    %158 = vmatpush.msra.mxu0 0.0
    %159 = vmatpush.msra.mxu0 0.0
    %160 = vmatpush.msra.mxu0 0.0
    %161 = vmatpush.msra.mxu0 0.0
    %162 = vmatpush.msra.mxu0 0.0
    %163 = vmatpush.msra.mxu0 0.0
    %164 = vmatpush.msra.mxu0 %v145
    %165 = vmatpush.msra.mxu0 %v144
    %166 = vmatpush.msra.mxu0 %v143
    %167 = vmatpush.msra.mxu0 %v142
    %168 = vmatpush.msra.mxu0 %v141
    %169 = vmatpush.msra.mxu0 %v140
    %170 = vmatpush.msra.mxu0 %v139
    %171 = vmatpush.msra.mxu0 %v138
    %172 = vmatmul.f32.gmra.mxu0 %v151
    %v173 = vpop.f32.mrf.mxu0
    %v174 = vadd.f32 %v148, %v173
    %175 = vmatmul.f32.gmra.mxu0 %v154
    %v176 = vpop.f32.mrf.mxu0
    %v177 = vadd.f32 %v148, %v176
    %178 = vdwg.mxu0
    %v179 = vmax.f32 %v174, -20.0
    %v180 = vmax.f32 %v177, -20.0
    %v181 = vmin.f32 %v179, 2.0
    %v182 = vmin.f32 %v180, 2.0
    %v183 = vmul.f32 %v181, 1.442695
    %v184 = vpow.pop %v183
    %v185 = vmul.f32 %v182, 1.442695
    %v186 = vpow.pop %v185
    %189 = vrot.lane.b32.xlu0 %v48, 4
    %v190 = vpop.permute.xlu0 %189
    %191 = vrot.lane.b32.xlu0 %v49, 4
    %v192 = vpop.permute.xlu0 %191
    %v195 = vmul.f32 %v184, %v190
    %v196 = vmul.f32 %v186, %v192
    %199 = vrot.lane.b32.xlu0 %v195, 124
    %v200 = vpop.permute.xlu0 %199
    %201 = vrot.lane.b32.xlu0 %v196, 124
    %v202 = vpop.permute.xlu0 %201
    %v205 = vadd.f32 %v174, %v200
    %v206 = vadd.f32 %v177, %v202
    %v207 = vtanh.pop %v205
    %v208 = vtanh.pop %v206
    %v209 = vmul.f32 %v48, -0.5
    %v210 = vmul.f32 %v49, -0.5
    %v211 = vmul.f32 %v209, %v48
    %v212 = vmul.f32 %v210, %v49
    %215 = vrot.lane.b32.xlu0 %v181, 124
    %v216 = vpop.permute.xlu0 %215
    %217 = vrot.lane.b32.xlu0 %v182, 124
    %v218 = vpop.permute.xlu0 %217
    %v221 = vsub.f32 %v211, %v216
    %v222 = vsub.f32 %v212, %v218
    %v223 = vsub.f32 %v221, 0.9189385
    %v224 = vsub.f32 %v222, 0.9189385
    %v225 = vsub.f32 0.6931472, %v205
    %v226 = vsub.f32 0.6931472, %v206
    %v227 = vmul.f32 %v205, -2.0
    %v228 = vmul.f32 %v206, -2.0
    %v229 = vmax.f32 %v227, 0.0
    %v230 = vmax.f32 %v228, 0.0
    %vm231 = vcmp.ne.f32.partialorder %v227, %v227
    %vm232 = vcmp.ne.f32.partialorder %v228, %v228
    %v233 = vadd.f32 %v227, 0.0
    %v234 = vadd.f32 %v228, 0.0
    %v235 = vand.u32 2147483647, %v227
    %v236 = vand.u32 2147483647, %v228
    %v237 = vsub.f32 0.0, %v235
    %v238 = vsub.f32 0.0, %v236
    %v239 = vmul.f32 %v237, 1.442695
    %v240 = vpow.pop %v239
    %v241 = vmul.f32 %v238, 1.442695
    %v242 = vpow.pop %v241
    %v243 = vadd.f32 %v240, 1.0
    %v244 = vlog2.pop %v243
    %v245 = vmul.f32 %v244, 0.6931472
    %v246 = vmul.f32 -0.5, %v240
    %v247 = vadd.f32 %v246, 1.0
    %v248 = vmul.f32 %v247, %v240
    %v249 = vand.u32 2147483647, %v240
    %vm250 = vcmp.lt.f32.partialorder %v249, 0.0004427343
    %v251 = vsel %vm250, %v248, %v245
    %v252 = vadd.f32 %v242, 1.0
    %v253 = vlog2.pop %v252
    %v254 = vmul.f32 %v253, 0.6931472
    %v255 = vmul.f32 -0.5, %v242
    %v256 = vadd.f32 %v255, 1.0
    %v257 = vmul.f32 %v256, %v242
    %v258 = vand.u32 2147483647, %v242
    %vm259 = vcmp.lt.f32.partialorder %v258, 0.0004427343
    %v260 = vsel %vm259, %v257, %v254
    %v261 = vadd.f32 %v229, %v251
    %v262 = vadd.f32 %v230, %v260
    %v263 = vsel %vm231, %v233, %v261
    %v264 = vsel %vm232, %v234, %v262
    %v265 = vsub.f32 %v225, %v263
    %v266 = vsub.f32 %v226, %v264
    %v267 = vmul.f32 %v265, 2.0
    %v268 = vmul.f32 %v266, 2.0
    %v269 = vsub.f32 %v223, %v267
    %v270 = vsub.f32 %v224, %v268
    %vm271 = vcmask 31744
    %v272 = vsel %vm271, %v269, 0.0
    %273 = vadd.xlane.f32.xlu0 %v272
    %v274 = vpop.xlane.xlu0 %273
    %v275 = vsel %vm271, %v270, 0.0
    %276 = vadd.xlane.f32.xlu0 %v275
    %v277 = vpop.xlane.xlu0 %276
    %v278 = vmax.f32 %v174, 0.0
    %v279 = vmax.f32 %v177, 0.0
    %vm280 = vcmp.ne.f32.partialorder %v174, %v174
    %vm281 = vcmp.ne.f32.partialorder %v177, %v177
    %v282 = vadd.f32 %v174, 0.0
    %v283 = vadd.f32 %v177, 0.0
    %v284 = vand.u32 2147483647, %v174
    %v285 = vand.u32 2147483647, %v177
    %v286 = vsub.f32 0.0, %v284
    %v287 = vsub.f32 0.0, %v285
    %v288 = vmul.f32 %v286, 1.442695
    %v289 = vpow.pop %v288
    %v290 = vmul.f32 %v287, 1.442695
    %v291 = vpow.pop %v290
    %v292 = vadd.f32 %v289, 1.0
    %v293 = vlog2.pop %v292
    %v294 = vmul.f32 %v293, 0.6931472
    %v295 = vmul.f32 -0.5, %v289
    %v296 = vadd.f32 %v295, 1.0
    %v297 = vmul.f32 %v296, %v289
    %v298 = vand.u32 2147483647, %v289
    %vm299 = vcmp.lt.f32.partialorder %v298, 0.0004427343
    %v300 = vsel %vm299, %v297, %v294
    %v301 = vadd.f32 %v291, 1.0
    %v302 = vlog2.pop %v301
    %v303 = vmul.f32 %v302, 0.6931472
    %v304 = vmul.f32 -0.5, %v291
    %v305 = vadd.f32 %v304, 1.0
    %v306 = vmul.f32 %v305, %v291
    %v307 = vand.u32 2147483647, %v291
    %vm308 = vcmp.lt.f32.partialorder %v307, 0.0004427343
    %v309 = vsel %vm308, %v306, %v303
    %v310 = vadd.f32 %v278, %v300
    %v311 = vadd.f32 %v279, %v309
    %v312 = vsel %vm280, %v282, %v310
    %v313 = vsel %vm281, %v283, %v311
    %316 = vrot.lane.b32.xlu0 %v174, 120
    %v317 = vpop.permute.xlu0 %316
    %318 = vrot.lane.b32.xlu0 %v177, 120
    %v319 = vpop.permute.xlu0 %318
    %v322 = vrot.slane %v317, 7
    %v323 = vrot.slane %v319, 7
    %v324 = vlaneseq
    %v325 = vshrl.u32 %v324, 7
    %vm326 = vcmp.lt.s32.totalorder %v325, 1
    %v327 = vsel %vm326, %v322, %v323
    %v328 = vsel %vm326, %v323, %v322
    %331 = vrot.lane.b32.xlu0 %v312, 115
    %v332 = vpop.permute.xlu0 %331
    %333 = vrot.lane.b32.xlu0 %v313, 115
    %v334 = vpop.permute.xlu0 %333
    %v337 = vrot.slane %v332, 7
    %v338 = vrot.slane %v334, 7
    %v339 = vsel %vm326, %v337, %v338
    %v340 = vsel %vm326, %v338, %v337
    %v341 = vadd.s32 %v325, 8
    %vm342 = vcmp.lt.s32.totalorder %v325, 0
    %v343 = vsub.s32 0, %v325
    %v344 = vsel %vm342, %v343, %v325
    %v345 = vshrl.u32 %v344, 3
    %v346 = vand.u32 %v344, 7
    %v347 = vsub.s32 0, %v346
    %v348 = vsel %vm342, %v347, %v346
    %vm349 = vcmp.lt.s32.totalorder %v341, 0
    %v350 = vsub.s32 0, %v341
    %v351 = vsel %vm349, %v350, %v341
    %v352 = vshrl.u32 %v351, 3
    %v353 = vand.u32 %v351, 7
    %v354 = vsub.s32 0, %v353
    %v355 = vsel %vm349, %v354, %v353
    %vm356 = vcmp.ne.s32.totalorder %v348, 0
    %vm357 = vcmp.ne.s32.totalorder %v355, 0
    %vm358 = vcmp.lt.s32.totalorder %v348, 0
    %vm359 = vcmp.lt.s32.totalorder %v355, 0
    %vm360 = vmand %vm358, %vm356
    %vm361 = vmand %vm359, %vm357
    %v362 = vadd.s32 %v348, 8
    %v363 = vadd.s32 %v355, 8
    %v364 = vsel %vm360, %v362, %v348
    %v365 = vsel %vm361, %v363, %v355
    %vm366 = vcmp.eq.s32.totalorder %v364, 0
    %vm367 = vcmp.eq.s32.totalorder %v365, 0
    %v368 = vsel %vm366, 1, 0
    %v369 = vsel %vm367, 1, 0
    %vm370 = vcmp.eq.s32.totalorder %v368, 1
    %vm371 = vcmp.eq.s32.totalorder %v369, 1
    %v372 = vsel %vm370, 0.0, %v328
    %v373 = vsel %vm371, 0.0, %v327
    %v374 = vsel %vm370, 1.0, %v340
    %v375 = vsel %vm371, 1.0, %v339
    %378 = vrot.lane.b32.xlu0 %v374, 13
    %v379 = vpop.permute.xlu0 %378
    %380 = vrot.lane.b32.xlu0 %v375, 13
    %v381 = vpop.permute.xlu0 %380
    %v384 = vrcp.pop %v379
    %v385 = vmul.f32 %v379, %v384
    %v386 = vsub.f32 1.0, %v385
    %v387 = vmul.f32 %v384, %v386
    %v388 = vadd.f32 %v384, %v387
    %vm389 = vweird.f32 %v379
    %vm390 = vweird.f32 %v384
    %vm391 = vmor %vm389, %vm390
    %v392 = vsel %vm391, %v384, %v388
    %v393 = vand.u32 2147483647, %v379
    %vm394 = vcmp.eq.f32.partialorder %v393, 8.507059e+37
    %v395 = vand.u32 %v379, 2147483648
    %v396 = vor.u32 1.1754944e-38, %v395
    %v397 = vsel %vm394, %v396, %v392
    %v398 = vmul.f32 %v312, %v397
    %v399 = vrcp.pop %v381
    %v400 = vmul.f32 %v381, %v399
    %v401 = vsub.f32 1.0, %v400
    %v402 = vmul.f32 %v399, %v401
    %v403 = vadd.f32 %v399, %v402
    %vm404 = vweird.f32 %v381
    %vm405 = vweird.f32 %v399
    %vm406 = vmor %vm404, %vm405
    %v407 = vsel %vm406, %v399, %v403
    %v408 = vand.u32 2147483647, %v381
    %vm409 = vcmp.eq.f32.partialorder %v408, 8.507059e+37
    %v410 = vand.u32 %v381, 2147483648
    %v411 = vor.u32 1.1754944e-38, %v410
    %v412 = vsel %vm409, %v411, %v407
    %v413 = vmul.f32 %v313, %v412
    %v414 = vmul.f32 %v398, %v398
    %v415 = vmul.f32 %v413, %v413
    %v416 = vlog2.pop %v398
    %v417 = vmul.f32 %v416, 0.6931472
    %v418 = vlog2.pop %v413
    %v419 = vmul.f32 %v418, 0.6931472
    %v420 = vmul.f32 %v417, 2.0
    %v421 = vmul.f32 %v419, 2.0
    %v422 = vsub.f32 %v414, %v420
    %v423 = vsub.f32 %v415, %v421
    %v424 = vsub.f32 %v372, %v317
    %v425 = vsub.f32 %v373, %v319
    %v426 = vrcp.pop %v374
    %v427 = vmul.f32 %v374, %v426
    %v428 = vsub.f32 1.0, %v427
    %v429 = vmul.f32 %v426, %v428
    %v430 = vadd.f32 %v426, %v429
    %vm431 = vweird.f32 %v374
    %vm432 = vweird.f32 %v426
    %vm433 = vmor %vm431, %vm432
    %v434 = vsel %vm433, %v426, %v430
    %v435 = vand.u32 2147483647, %v374
    %vm436 = vcmp.eq.f32.partialorder %v435, 8.507059e+37
    %v437 = vand.u32 %v374, 2147483648
    %v438 = vor.u32 1.1754944e-38, %v437
    %v439 = vsel %vm436, %v438, %v434
    %v440 = vmul.f32 %v424, %v439
    %v441 = vrcp.pop %v375
    %v442 = vmul.f32 %v375, %v441
    %v443 = vsub.f32 1.0, %v442
    %v444 = vmul.f32 %v441, %v443
    %v445 = vadd.f32 %v441, %v444
    %vm446 = vweird.f32 %v375
    %vm447 = vweird.f32 %v441
    %vm448 = vmor %vm446, %vm447
    %v449 = vsel %vm448, %v441, %v445
    %v450 = vand.u32 2147483647, %v375
    %vm451 = vcmp.eq.f32.partialorder %v450, 8.507059e+37
    %v452 = vand.u32 %v375, 2147483648
    %v453 = vor.u32 1.1754944e-38, %v452
    %v454 = vsel %vm451, %v453, %v449
    %v455 = vmul.f32 %v425, %v454
    %v456 = vmul.f32 %v440, %v440
    %v457 = vmul.f32 %v455, %v455
    %460 = vrot.lane.b32.xlu0 %v456, 13
    %v461 = vpop.permute.xlu0 %460
    %462 = vrot.lane.b32.xlu0 %v457, 13
    %v463 = vpop.permute.xlu0 %462
    %v466 = vadd.f32 %v422, %v461
    %v467 = vadd.f32 %v423, %v463
    %v468 = vsub.f32 %v466, 1.0
    %v469 = vsub.f32 %v467, 1.0
    %472 = vrot.lane.b32.xlu0 %v468, 115
    %v473 = vpop.permute.xlu0 %472
    %474 = vrot.lane.b32.xlu0 %v469, 115
    %v475 = vpop.permute.xlu0 %474
    %vm478 = vcmask 39936
    %v479 = vsel %vm478, %v473, 0.0
    %480 = vadd.xlane.f32.xlu0 %v479
    %v481 = vpop.xlane.xlu0 %480
    %v482 = vsel %vm478, %v475, 0.0
    %483 = vadd.xlane.f32.xlu0 %v482
    %v484 = vpop.xlane.xlu0 %483
    %v485 = vmul.f32 %v481, 0.5
    %v486 = vmul.f32 %v484, 0.5
    %487 = vrot.lane.b32.xlu0 %v174, 4
    %v488 = vpop.permute.xlu0 %487
    %489 = vrot.lane.b32.xlu0 %v177, 4
    %v490 = vpop.permute.xlu0 %489
    %493 = vrot.lane.b32.xlu0 %v181, 4
    %v494 = vpop.permute.xlu0 %493
    %495 = vrot.lane.b32.xlu0 %v182, 4
    %v496 = vpop.permute.xlu0 %495
    %v499 = vsel %vm271, %v207, %v488
    %v500 = vsel %vm271, %v208, %v490
    %vm501 = vcmask 64512
    %v502 = vsel %vm501, %v499, %v494
    %v503 = vsel %vm501, %v500, %v496
    %vm504 = vcmask 97280
    %v505 = vsel %vm504, %v502, %v274
    %v506 = vsel %vm504, %v503, %v277
    %vm507 = vcmask 105472
    %v508 = vsel %vm507, %v505, %v485
    %v509 = vsel %vm507, %v506, %v486
    %vm510 = vcmask 113664
    %v511 = vsel %vm510, %v508, 0.0
    %v512 = vsel %vm510, %v509, 0.0
    %513 = vst [vmem:[#allocation5] sm:$0xff] %v511
    %514 = vst [vmem:[#allocation5 + $0x8] sm:$0xff] %v512
    // Predicated region
    $region38: #{tpu_custom_call.1} parent=1 // pred_check
      _
    $region39: #{tpu_custom_call.1} parent=1 // pred_check_branch
      %516 = sbr.rel (0) target = $region41
    $region40: #{tpu_custom_call.1} parent=1 // pred_region
      %518 = vsyncadd [#allocation4], 0
      %s519 = sshll.u32 [#allocation5], 4
      %s520 = int_to_ptr.vmem [resolvable:$true] %s519
      %s521 = sshll.u32 %s8, 4
      %s522 = int_to_ptr.hbm [resolvable:$true] %s521
      %527 = dma.vmem_to_hbm [thread:$0]  %s520, 256, %s522, [#allocation4], 128, 128, 8
    $region41: #{tpu_custom_call.1} parent=1 // pred_fallthru
      _
    // Predicated region
    $region42: #{tpu_custom_call.1} parent=1 // pred_check
      _
    $region43: #{tpu_custom_call.1} parent=1 // pred_check_branch
      %529 = sbr.rel (0) target = $region45
    $region44: #{tpu_custom_call.1} parent=1 // pred_region
      %531 = dma.done [#allocation4], 256
    $region45: #{tpu_custom_call.1} parent=1 // pred_fallthru
      _
    %532 = vsyncpa [#allocation3], 1
    %533 = vsyncpa [#allocation4], 1

</llo_original>
